<compile_context>
chip_gen: v6e
topology: v6e:2x2x1
jax: 0.10.0
libtpu: 0.0.40
codegen_flags: <defaults>
</compile_context>

<pallas_src>
import math

import jax
import jax.numpy as jnp
from jax.experimental import pallas as pl
from jax.experimental.pallas import tpu as pltpu

LANE = 128                      # TPU lane width: matmul N dims / outputs padded to this
MXU_DTYPE = jnp.bfloat16        # MXU operand dtype (f32 accumulation)


def _round_up(x, m):
    return (x + m - 1) // m * m


# ----------------------------- fused Pallas kernel ------------------------- #

def _make_textcnn_kernel(with_conv_out):
    def kernel(win_ref, wconv_ref, bconv_ref, w1_ref, b1_ref, w2_ref, b2_ref,
               *out_refs):
        """One batch row: conv (all filter sizes) + global max-pool + fc1 -> fc2.

        win_ref:    (L, K)           bf16  im2col windows, K = f_max*E (lane-dense)
        wconv_ref:  (K, NC_PAD)      bf16  folded conv weights, all branches,
                                           per-branch "same"-pad shift baked in
        bconv_ref:  (1, NC_PAD)      f32
        w1_ref:     (NC_PAD, NH_PAD) bf16
        b1_ref:     (1, NH_PAD)      f32
        w2_ref:     (NH_PAD, NL_PAD) bf16
        b2_ref:     (1, NL_PAD)      f32
        out_refs:   [(L, NC_PAD) f32 conv,]  (1, NL_PAD) f32 logits
        """
        mxu = wconv_ref.dtype

        # Every filter-size branch in one lane-dense K=128 MXU pass (f32 acc).
        conv = jnp.dot(win_ref[...], wconv_ref[...],
                       preferred_element_type=jnp.float32) + bconv_ref[...]

        if with_conv_out:
            conv_ref, logits_ref = out_refs
            conv_ref[...] = conv            # lane-dense (L, 128) unmasked store
        else:
            (logits_ref,) = out_refs

        # Global max-pool over time == concat of per-branch max_pool1d results.
        # Padded channels are exactly 0 (zero weights & bias) and meet zero rows
        # of w1, so they never affect valid outputs.
        z = jnp.max(conv, axis=0, keepdims=True)            # (1, NC_PAD) f32

        # fc1 -> dropout (identity at inference) -> fc2, entirely in VMEM.
        # TODO(synk): nn.Dropout is identity in eval mode; training-mode dropout
        # is not implemented.
        h = jnp.dot(z.astype(mxu), w1_ref[...],
                    preferred_element_type=jnp.float32) + b1_ref[...]
        logits_ref[...] = (jnp.dot(h.astype(mxu), w2_ref[...],
                                   preferred_element_type=jnp.float32)
                           + b2_ref[...])
    return kernel


def _fused_forward_call(windows, w_conv, b_conv, w1, b1, w2, b2, *,
                        return_conv_outputs):
    B, L, K = windows.shape
    NC_PAD = w_conv.shape[1]
    NH_PAD = w1.shape[1]
    NL_PAD = w2.shape[1]

    const = lambda b: (0, 0)    # weights / biases: constant block -> VMEM-resident
    in_specs = [
        pl.BlockSpec((None, L, K), lambda b: (b, 0, 0)),   # one batch row per step
        pl.BlockSpec((K, NC_PAD), const),
        pl.BlockSpec((1, NC_PAD), const),
        pl.BlockSpec((NC_PAD, NH_PAD), const),
        pl.BlockSpec((1, NH_PAD), const),
        pl.BlockSpec((NH_PAD, NL_PAD), const),
        pl.BlockSpec((1, NL_PAD), const),
    ]
    logits_shape = jax.ShapeDtypeStruct((B, 1, NL_PAD), jnp.float32)
    logits_spec = pl.BlockSpec((None, 1, NL_PAD), lambda b: (b, 0, 0))
    if return_conv_outputs:
        out_shape = (jax.ShapeDtypeStruct((B, L, NC_PAD), jnp.float32),
                     logits_shape)
        out_specs = (pl.BlockSpec((None, L, NC_PAD), lambda b: (b, 0, 0)),
                     logits_spec)
    else:
        out_shape = logits_shape
        out_specs = logits_spec

    flops = 2 * B * (L * K * NC_PAD + NC_PAD * NH_PAD + NH_PAD * NL_PAD)
    bytes_accessed = (windows.size * 2
                      + (w_conv.size + w1.size + w2.size) * 2
                      + (b_conv.size + b1.size + b2.size) * 4
                      + B * NL_PAD * 4
                      + (B * L * NC_PAD * 4 if return_conv_outputs else 0))

    # Scaling note: when B (or B*L) grows, tile the M axis in 256-512 row blocks
    # (still "parallel"), keep constant index_maps on the weight slabs, and on
    # v7x budget for 64 MiB physical VMEM / make sure the parallel axis has >=2
    # blocks so both TensorCores get work.  v6e/v7x prefer 256-wide N tiles once
    # the matmuls actually dominate; at these toy sizes the kernel is layout /
    # overhead bound, not MXU bound.
    return pl.pallas_call(
        _make_textcnn_kernel(return_conv_outputs),
        out_shape=out_shape,
        grid_spec=pltpu.PrefetchScalarGridSpec(
            num_scalar_prefetch=0,
            grid=(B,),
            in_specs=in_specs,
            out_specs=out_specs),
        compiler_params=pltpu.CompilerParams(
            dimension_semantics=("parallel",),
            vmem_limit_bytes=32 * 1024 * 1024),
        cost_estimate=pl.CostEstimate(flops=flops, transcendentals=0,
                                      bytes_accessed=bytes_accessed),
    )(windows, w_conv, b_conv, w1, b1, w2, b2)


# ------------------------------- parameters -------------------------------- #

def init_params(key, *, vocab_size, embedding_dim, num_filters, filter_sizes,
                hidden_dim, num_classes, padding_idx=0):
    n_keys = 1 + 2 * len(filter_sizes) + 4
    keys = jax.random.split(key, n_keys)
    ki = iter(range(n_keys))

    emb = jax.random.normal(keys[next(ki)], (vocab_size, embedding_dim), jnp.float32)
    emb = emb.at[padding_idx].set(0.0)   # padding_idx row is zero, like nn.Embedding

    convs = []
    for f in filter_sizes:
        bound = 1.0 / math.sqrt(embedding_dim * f)
        # conv weight stored tap-major: (f, E, F)  (PyTorch layout is (F, E, f))
        w = jax.random.uniform(keys[next(ki)], (f, embedding_dim, num_filters),
                               jnp.float32, -bound, bound)
        bb = jax.random.uniform(keys[next(ki)], (1, num_filters),
                                jnp.float32, -bound, bound)
        convs.append((w, bb))

    fin = num_filters * len(filter_sizes)
    b1_bound = 1.0 / math.sqrt(fin)
    w1 = jax.random.uniform(keys[next(ki)], (fin, hidden_dim), jnp.float32,
                            -b1_bound, b1_bound)
    b1 = jax.random.uniform(keys[next(ki)], (1, hidden_dim), jnp.float32,
                            -b1_bound, b1_bound)
    b2_bound = 1.0 / math.sqrt(hidden_dim)
    w2 = jax.random.uniform(keys[next(ki)], (hidden_dim, num_classes), jnp.float32,
                            -b2_bound, b2_bound)
    b2 = jax.random.uniform(keys[next(ki)], (1, num_classes), jnp.float32,
                            -b2_bound, b2_bound)
    return dict(emb=emb, convs=convs, w1=w1, b1=b1, w2=w2, b2=b2)


def prepare_params(params, *, filter_sizes, embedding_dim, num_filters,
                   hidden_dim, num_classes, mxu_dtype=MXU_DTYPE):
    """Fold + pad parameters for the fused kernel (done once, host-side).

    * conv weights of all branches are folded into one (f_max*E, NC_PAD) slab;
      each branch's taps are placed at sublane offset (pad_l_max - pad_l_f)*E so
      the branch's own PyTorch "same" padding is reproduced from the single
      max-padded input.
    * all matmul N dims (conv channels, hidden, classes) are zero-padded to
      multiples of 128 lanes (lane-dense MXU tiles / unmasked stores).
    * embeddings are stored bf16 so the x path is bf16 end-to-end.
    """
    f_max = max(filter_sizes)
    E, F = embedding_dim, num_filters
    nb = len(filter_sizes)
    NC = nb * F
    NC_PAD = _round_up(NC, LANE)
    NH_PAD = _round_up(hidden_dim, LANE)
    NL_PAD = _round_up(num_classes, LANE)
    K = f_max * E

    pad_l_max = (f_max - 1) // 2
    w_fold = jnp.zeros((K, NC_PAD), jnp.float32)
    b_fold = jnp.zeros((1, NC_PAD), jnp.float32)
    for i, ((w, b), f) in enumerate(zip(params['convs'], filter_sizes)):
        shift = pad_l_max - (f - 1) // 2          # branch's tap offset in f_max window
        for k in range(f):
            j = k + shift
            w_fold = w_fold.at[j * E:(j + 1) * E, i * F:(i + 1) * F].set(w[k])
        b_fold = b_fold.at[:, i * F:(i + 1) * F].set(b)

    # Invariant the max-pool / fc1 rely on: padded channels produce exactly 0.
    if NC_PAD > NC:
        assert float(jnp.max(jnp.abs(w_fold[:, NC:]))) == 0.0
        assert float(jnp.max(jnp.abs(b_fold[:, NC:]))) == 0.0

    w1p = jnp.zeros((NC_PAD, NH_PAD), jnp.float32).at[:NC, :hidden_dim].set(params['w1'])
    b1p = jnp.zeros((1, NH_PAD), jnp.float32).at[:, :hidden_dim].set(params['b1'])
    w2p = jnp.zeros((NH_PAD, NL_PAD), jnp.float32).at[:hidden_dim, :num_classes].set(params['w2'])
    b2p = jnp.zeros((1, NL_PAD), jnp.float32).at[:, :num_classes].set(params['b2'])

    return dict(
        emb=params['emb'].astype(mxu_dtype),               # bf16 x path
        w_conv=w_fold.astype(mxu_dtype), b_conv=b_fold,    # biases stay f32
        w1=w1p.astype(mxu_dtype), b1=b1p,
        w2=w2p.astype(mxu_dtype), b2=b2p,
    )


# -------------------------------- forward ---------------------------------- #

def make_forward(filter_sizes, num_filters, num_classes, *,
                 return_conv_outputs=True):
    f_max = max(filter_sizes)
    nb = len(filter_sizes)
    F = num_filters

    @jax.jit
    def forward(fp, x_tokens):
        # Embedding gather (bf16) + single "same" pad at the max filter size +
        # wrapper-side im2col -> lane-dense (B, L, f_max*E) slab.  All plain-JAX
        # glue fused by XLA around the single kernel launch; smaller filters are
        # handled by the tap shift baked into the folded weights.
        x_emb = jnp.take(fp['emb'], x_tokens, axis=0)            # (B, L, E) bf16
        L = x_emb.shape[1]
        pad_l = (f_max - 1) // 2
        pad_r = (f_max - 1) - pad_l
        x_pad = jnp.pad(x_emb, ((0, 0), (pad_l, pad_r), (0, 0)))
        windows = jnp.concatenate([x_pad[:, j:j + L, :] for j in range(f_max)],
                                  axis=-1)                        # (B, L, f_max*E)

        out = _fused_forward_call(windows, fp['w_conv'], fp['b_conv'],
                                  fp['w1'], fp['b1'], fp['w2'], fp['b2'],
                                  return_conv_outputs=return_conv_outputs)
        if return_conv_outputs:
            conv_blc, logits_pad = out
            # NCL transpose + per-branch channel slices are wrapper-side XLA.
            conv_ncl = jnp.transpose(conv_blc, (0, 2, 1))         # (B, NC_PAD, L)
            conv_outputs = tuple(conv_ncl[:, i * F:(i + 1) * F, :]
                                 for i in range(nb))
            return conv_outputs, logits_pad[:, 0, :num_classes]
        return out[:, 0, :num_classes]

    return forward


def reference_forward(params, x_tokens, filter_sizes):
    """Pure-JAX f32 reference (PyTorch math, no Pallas) for a sanity check."""
    x_emb = jnp.take(params['emb'], x_tokens, axis=0)
    L = x_emb.shape[1]
    conv_outputs, pooled = [], []
    for (w, b), f in zip(params['convs'], filter_sizes):
        pad_l = (f - 1) // 2
        pad_r = (f - 1) - pad_l
        x_pad = jnp.pad(x_emb, ((0, 0), (pad_l, pad_r), (0, 0)))
        acc = sum(jnp.einsum('ble,ef->blf', x_pad[:, k:k + L, :], w[k])
                  for k in range(f)) + b
        conv_outputs.append(jnp.transpose(acc, (0, 2, 1)))
        pooled.append(jnp.max(acc, axis=1))
    z = jnp.concatenate(pooled, axis=1)
    h = z @ params['w1'] + params['b1']
    logits = h @ params['w2'] + params['b2']
    return conv_outputs, logits


# ---------------------------------- main ------------------------------------ #

if __name__ == "__main__":
    vocab_size, embedding_dim = 50, 32
    num_filters, filter_sizes = 8, (2, 3, 4)
    hidden_dim, num_classes = 32, 4
    B, L = 2, 16

    key = jax.random.PRNGKey(0)
    pkey, xkey = jax.random.split(key)
    params = init_params(pkey, vocab_size=vocab_size, embedding_dim=embedding_dim,
                         num_filters=num_filters, filter_sizes=filter_sizes,
                         hidden_dim=hidden_dim, num_classes=num_classes)
    fused_params = prepare_params(params, filter_sizes=filter_sizes,
                                  embedding_dim=embedding_dim,
                                  num_filters=num_filters, hidden_dim=hidden_dim,
                                  num_classes=num_classes)
    x_tokens = jax.random.randint(xkey, (B, L), 0, vocab_size, dtype=jnp.int32)

    # Full forward (conv_outputs + logits), matching the PyTorch module.
    forward = make_forward(filter_sizes, num_filters, num_classes)
    conv_outputs, logits = forward(fused_params, x_tokens)
    jax.block_until_ready((conv_outputs, logits))

    # Logits-only fast path: skips the conv writeback entirely.
    forward_logits = make_forward(filter_sizes, num_filters, num_classes,
                                  return_conv_outputs=False)
    logits_only = forward_logits(fused_params, x_tokens)
    jax.block_until_ready(logits_only)

    # Sanity check vs. a pure-f32 JAX reference.  The kernel uses bf16 MXU
    # operands with f32 accumulation, hence the loose tolerance.
    ref_convs, ref_logits = reference_forward(params, x_tokens, filter_sizes)
    for c, rc in zip(conv_outputs, ref_convs):
        assert c.shape == rc.shape
        assert jnp.allclose(c, rc, atol=3e-2, rtol=3e-2), \
            float(jnp.max(jnp.abs(c - rc)))
    assert logits.shape == (B, num_classes)
    assert jnp.allclose(logits, ref_logits, atol=3e-2, rtol=3e-2), \
        float(jnp.max(jnp.abs(logits - ref_logits)))
    assert jnp.allclose(logits_only, logits, atol=1e-5, rtol=1e-5), \
        float(jnp.max(jnp.abs(logits_only - logits)))

    print("KERNEL_OK")
</pallas_src>

<mosaic_0001>
module attributes {stable_mosaic.version = 11 : i64} {
  func.func @kernel(%arg0: i32, %arg1: memref<1x16x128xbf16, #tpu.memory_space<vmem>>, %arg2: memref<128x128xbf16, #tpu.memory_space<vmem>>, %arg3: memref<1x128xf32, #tpu.memory_space<vmem>>, %arg4: memref<128x128xbf16, #tpu.memory_space<vmem>>, %arg5: memref<1x128xf32, #tpu.memory_space<vmem>>, %arg6: memref<128x128xbf16, #tpu.memory_space<vmem>>, %arg7: memref<1x128xf32, #tpu.memory_space<vmem>>, %arg8: memref<1x16x128xf32, #tpu.memory_space<vmem>>, %arg9: memref<1x1x128xf32, #tpu.memory_space<vmem>>) attributes {dimension_semantics = [#tpu.dimension_semantics<parallel>], iteration_bounds = array<i64: 2>, scalar_prefetch = 0 : i64, scratch_operands = 0 : i64, tpu.core_type = #tpu.core_type<tc>, window_params = [{transform_indices = @transform_0, window_bounds = array<i64: 1, 16, 128>}, {pipeline_mode = #tpu.pipeline_mode<synchronous>, transform_indices = @transform_1, window_bounds = array<i64: 128, 128>}, {pipeline_mode = #tpu.pipeline_mode<synchronous>, transform_indices = @transform_2, window_bounds = array<i64: 1, 128>}, {pipeline_mode = #tpu.pipeline_mode<synchronous>, transform_indices = @transform_3, window_bounds = array<i64: 128, 128>}, {pipeline_mode = #tpu.pipeline_mode<synchronous>, transform_indices = @transform_4, window_bounds = array<i64: 1, 128>}, {pipeline_mode = #tpu.pipeline_mode<synchronous>, transform_indices = @transform_5, window_bounds = array<i64: 128, 128>}, {pipeline_mode = #tpu.pipeline_mode<synchronous>, transform_indices = @transform_6, window_bounds = array<i64: 1, 128>}, {transform_indices = @transform_7, window_bounds = array<i64: 1, 16, 128>}, {transform_indices = @transform_8, window_bounds = array<i64: 1, 1, 128>}]} {
    %c0 = arith.constant 0 : index
    %c0_0 = arith.constant 0 : index
    %c0_1 = arith.constant 0 : index
    %0 = vector.load %arg1[%c0, %c0_0, %c0_1] : memref<1x16x128xbf16, #tpu.memory_space<vmem>>, vector<1x16x128xbf16>
    %1 = vector.shape_cast %0 : vector<1x16x128xbf16> to vector<16x128xbf16>
    %c0_2 = arith.constant 0 : index
    %c0_3 = arith.constant 0 : index
    %2 = vector.load %arg2[%c0_2, %c0_3] : memref<128x128xbf16, #tpu.memory_space<vmem>>, vector<128x128xbf16>
    %cst = arith.constant dense<0.000000e+00> : vector<16x128xf32>
    %3 = tpu.matmul %1, %2, %cst {dimension_numbers = #tpu.dot_dimension_numbers<[1], [0], [0], [1], [0, 0, 1, 1], [], []>} : vector<16x128xbf16>, vector<128x128xbf16>, vector<16x128xf32> -> vector<16x128xf32>
    %c0_4 = arith.constant 0 : index
    %c0_5 = arith.constant 0 : index
    %4 = vector.load %arg3[%c0_4, %c0_5] : memref<1x128xf32, #tpu.memory_space<vmem>>, vector<1x128xf32>
    %5 = vector.broadcast %4 : vector<1x128xf32> to vector<16x128xf32>
    %6 = arith.addf %3, %5 : vector<16x128xf32>
    %c0_6 = arith.constant 0 : index
    %c0_7 = arith.constant 0 : index
    %c0_8 = arith.constant 0 : index
    %7 = vector.load %arg8[%c0_6, %c0_7, %c0_8] : memref<1x16x128xf32, #tpu.memory_space<vmem>>, vector<1x16x128xf32>
    %8 = vector.shape_cast %7 : vector<1x16x128xf32> to vector<16x128xf32>
    %9 = vector.shape_cast %6 : vector<16x128xf32> to vector<1x16x128xf32>
    tpu.vector_store %arg8[%c0_6, %c0_7, %c0_8], %9 {strides = array<i32>} : memref<1x16x128xf32, #tpu.memory_space<vmem>>, vector<1x16x128xf32>,
    %cst_9 = arith.constant dense<0xFF800000> : vector<128xf32>
    %10 = vector.multi_reduction <maximumf>, %6, %cst_9 [0] : vector<16x128xf32> to vector<128xf32>
    %11 = vector.shape_cast %10 : vector<128xf32> to vector<1x128xf32>
    %12 = arith.truncf %11 : vector<1x128xf32> to vector<1x128xbf16>
    %c0_10 = arith.constant 0 : index
    %c0_11 = arith.constant 0 : index
    %13 = vector.load %arg4[%c0_10, %c0_11] : memref<128x128xbf16, #tpu.memory_space<vmem>>, vector<128x128xbf16>
    %cst_12 = arith.constant dense<0.000000e+00> : vector<1x128xf32>
    %14 = tpu.matmul %12, %13, %cst_12 {dimension_numbers = #tpu.dot_dimension_numbers<[1], [0], [0], [1], [0, 0, 1, 1], [], []>} : vector<1x128xbf16>, vector<128x128xbf16>, vector<1x128xf32> -> vector<1x128xf32>
    %c0_13 = arith.constant 0 : index
    %c0_14 = arith.constant 0 : index
    %15 = vector.load %arg5[%c0_13, %c0_14] : memref<1x128xf32, #tpu.memory_space<vmem>>, vector<1x128xf32>
    %16 = arith.addf %14, %15 : vector<1x128xf32>
    %17 = arith.truncf %16 : vector<1x128xf32> to vector<1x128xbf16>
    %c0_15 = arith.constant 0 : index
    %c0_16 = arith.constant 0 : index
    %18 = vector.load %arg6[%c0_15, %c0_16] : memref<128x128xbf16, #tpu.memory_space<vmem>>, vector<128x128xbf16>
    %cst_17 = arith.constant dense<0.000000e+00> : vector<1x128xf32>
    %19 = tpu.matmul %17, %18, %cst_17 {dimension_numbers = #tpu.dot_dimension_numbers<[1], [0], [0], [1], [0, 0, 1, 1], [], []>} : vector<1x128xbf16>, vector<128x128xbf16>, vector<1x128xf32> -> vector<1x128xf32>
    %c0_18 = arith.constant 0 : index
    %c0_19 = arith.constant 0 : index
    %20 = vector.load %arg7[%c0_18, %c0_19] : memref<1x128xf32, #tpu.memory_space<vmem>>, vector<1x128xf32>
    %21 = arith.addf %19, %20 : vector<1x128xf32>
    %c0_20 = arith.constant 0 : index
    %c0_21 = arith.constant 0 : index
    %c0_22 = arith.constant 0 : index
    %22 = vector.load %arg9[%c0_20, %c0_21, %c0_22] : memref<1x1x128xf32, #tpu.memory_space<vmem>>, vector<1x1x128xf32>
    %23 = vector.shape_cast %22 : vector<1x1x128xf32> to vector<1x128xf32>
    %24 = vector.shape_cast %21 : vector<1x128xf32> to vector<1x1x128xf32>
    tpu.vector_store %arg9[%c0_20, %c0_21, %c0_22], %24 {strides = array<i32>} : memref<1x1x128xf32, #tpu.memory_space<vmem>>, vector<1x1x128xf32>,
    return
  }
  func.func @transform_0(%arg0: i32) -> (i32, i32, i32) {
    %c0_i32 = arith.constant 0 : i32
    %c0_i32_0 = arith.constant 0 : i32
    %c0_i32_1 = arith.constant 0 : i32
    return %arg0, %c0_i32, %c0_i32_0 : i32, i32, i32
  }
  func.func @transform_1(%arg0: i32) -> (i32, i32) {
    %c0_i32 = arith.constant 0 : i32
    %c0_i32_0 = arith.constant 0 : i32
    %c0_i32_1 = arith.constant 0 : i32
    return %c0_i32, %c0_i32_0 : i32, i32
  }
  func.func @transform_2(%arg0: i32) -> (i32, i32) {
    %c0_i32 = arith.constant 0 : i32
    %c0_i32_0 = arith.constant 0 : i32
    %c0_i32_1 = arith.constant 0 : i32
    return %c0_i32, %c0_i32_0 : i32, i32
  }
  func.func @transform_3(%arg0: i32) -> (i32, i32) {
    %c0_i32 = arith.constant 0 : i32
    %c0_i32_0 = arith.constant 0 : i32
    %c0_i32_1 = arith.constant 0 : i32
    return %c0_i32, %c0_i32_0 : i32, i32
  }
  func.func @transform_4(%arg0: i32) -> (i32, i32) {
    %c0_i32 = arith.constant 0 : i32
    %c0_i32_0 = arith.constant 0 : i32
    %c0_i32_1 = arith.constant 0 : i32
    return %c0_i32, %c0_i32_0 : i32, i32
  }
  func.func @transform_5(%arg0: i32) -> (i32, i32) {
    %c0_i32 = arith.constant 0 : i32
    %c0_i32_0 = arith.constant 0 : i32
    %c0_i32_1 = arith.constant 0 : i32
    return %c0_i32, %c0_i32_0 : i32, i32
  }
  func.func @transform_6(%arg0: i32) -> (i32, i32) {
    %c0_i32 = arith.constant 0 : i32
    %c0_i32_0 = arith.constant 0 : i32
    %c0_i32_1 = arith.constant 0 : i32
    return %c0_i32, %c0_i32_0 : i32, i32
  }
  func.func @transform_7(%arg0: i32) -> (i32, i32, i32) {
    %c0_i32 = arith.constant 0 : i32
    %c0_i32_0 = arith.constant 0 : i32
    %c0_i32_1 = arith.constant 0 : i32
    return %arg0, %c0_i32, %c0_i32_0 : i32, i32, i32
  }
  func.func @transform_8(%arg0: i32) -> (i32, i32, i32) {
    %c0_i32 = arith.constant 0 : i32
    %c0_i32_0 = arith.constant 0 : i32
    %c0_i32_1 = arith.constant 0 : i32
    return %arg0, %c0_i32, %c0_i32_0 : i32, i32, i32
  }
}

</mosaic_0001>

<llo_original>
// kernel: forward.1
$region0: #{forward.1}
  #allocation0 [shape = 'u32[]', space=smem, size = 0x4, offset = 0x4, fixed_abs, tag = 'smem constant byte address 0x4 - core index']
  #allocation1 [shape = 'u32[144,128]{1,0:T(1,128)}', space=vmem, size = 0x12000, scoped, tag = 'internal scratch']
  %s0 = inlined_call_operand.vmem [shape: bf16[2,16,128], index: 0, kind: input, shape index: {}]
  %s1 = inlined_call_operand.vmem [shape: bf16[128,128], index: 1, kind: input, shape index: {}]
  %s2 = inlined_call_operand.vmem [shape: f32[1,128], index: 2, kind: input, shape index: {}]
  %s3 = inlined_call_operand.vmem [shape: bf16[128,128], index: 3, kind: input, shape index: {}]
  %s4 = inlined_call_operand.vmem [shape: f32[1,128], index: 4, kind: input, shape index: {}]
  %s5 = inlined_call_operand.vmem [shape: bf16[128,128], index: 5, kind: input, shape index: {}]
  %s6 = inlined_call_operand.vmem [shape: f32[1,128], index: 6, kind: input, shape index: {}]
  %s7 = inlined_call_operand.vmem [shape: f32[2,16,128], index: 7, kind: output, shape index: {0}]
  %s8 = inlined_call_operand.hbm [shape: f32[2,1,128], index: 8, kind: output, shape index: {1}]
  %9 = xla_tuple %s7, %s8
  %s10 = sld [smem:[#allocation0]]
  $region69: #{forward.1} parent=0
    _
  %s12 = ssub.s32 1, %s10
  %s13 = scalar_select 0, %s12, %s10
  $region1: #{forward.1} parent=0
    #allocation2 [shape = 'u8[1024]{0}', space=vmem, size = 0x400, scoped, tag = 'output window, operand 1']
    #allocation3 [shape = 's32[2]{0}', space=sflag, size = 0x8, scoped, tag = 'scoped memory for forward.1']
    %14 = vsyncpa [#allocation3], 0
    %s15 = scalar_lea.sflag [#allocation3], 1
    %16 = vsyncpa %s15, 0
    loop: start=0, step=1, limit=4
    $region2: #{forward.1} parent=1 // loop_pre_header
      _
    $region3: #{forward.1} parent=1 // loop_header
      %s18 = sphi 0, %s22
      %p19 = scmp.ge.s32.totalorder %s18, 4
      %s28 = sphi 0, %s30
      %s31 = sphi 0, %s28
      %s32 = sphi 0, %s31
      %s48 = sphi 0, %s32
      %s52 = sphi 0, %s52
      %s54 = sphi 0, %s52
      %s55 = sphi 0, %s54
      %s69 = sphi 0, %s55
      %s73 = sphi 0, %s73
      %s75 = sphi 0, %s73
      %s76 = sphi 0, %s75
      %s90 = sphi 0, %s76
      %s94 = sphi 0, %s94
      %s96 = sphi 0, %s94
      %s97 = sphi 0, %s96
      %s111 = sphi 0, %s97
      %s115 = sphi 0, %s115
      %s117 = sphi 0, %s115
      %s118 = sphi 0, %s117
      %s132 = sphi 0, %s118
      %s136 = sphi 0, %s136
      %s138 = sphi 0, %s136
      %s139 = sphi 0, %s138
      %s153 = sphi 0, %s139
      %s157 = sphi 0, %s157
      %s159 = sphi 0, %s157
      %s160 = sphi 0, %s159
      %s174 = sphi 0, %s160
      %s180 = sphi 0, %s182
      %s183 = sphi 0, %s180
      %s184 = sphi 0, %s183
      %s200 = sphi 0, %s184
      %s206 = sphi 0, %s208
      %s209 = sphi 0, %s206
      %s210 = sphi 0, %s209
      %s226 = sphi 0, %s210
    $region4: #{forward.1} parent=1 // loop_header_branch
      %21 = sbr.rel (%p19) target = $region8
    $region5: #{forward.1} parent=1 // loop_body
      %s23 = ssub.s32 %s18, 1
      %s24 = ssub.s32 %s18, 2
      %s25 = sadd.s32 %s18, 1
      %s26 = ssub.s32 %s18, %s25
      %p27 = scmp.eq.s32.totalorder %s26, 0
      %s29 = sadd.s32 %s28, 1
      %s30 = scalar_select %p27, %s28, %s29
      %p33 = pneg %p27
      %p34 = scmp.eq.s32.totalorder %s18, 1
      %p35 = por %p33, %p34
      %p36 = scmp.ne.s32.totalorder %s28, %s31
      %p37 = scmp.eq.s32.totalorder %s18, 0
      %p38 = por %p36, %p37
      %p39 = scmp.ne.s32.totalorder %s28, %s31
      %p40 = scmp.eq.s32.totalorder %s23, 1
      %p41 = por %p39, %p40
      %p42 = scmp.ne.s32.totalorder %s31, %s32
      %p43 = scmp.eq.s32.totalorder %s23, 0
      %p44 = por %p42, %p43
      %p45 = scmp.ne.s32.totalorder %s31, %s32
      %p46 = scmp.eq.s32.totalorder %s24, 1
      %p47 = por %p45, %p46
      %p49 = scmp.ne.s32.totalorder %s32, %s48
      %p50 = scmp.eq.s32.totalorder %s24, 0
      %p51 = por %p49, %p50
      %s53 = sadd.s32 %s52, 1
      %p56 = scmp.eq.s32.totalorder %s18, 1
      %p57 = scmp.ne.s32.totalorder %s52, %s54
      %p58 = scmp.eq.s32.totalorder %s18, 0
      %p59 = por %p57, %p58
      %p60 = scmp.ne.s32.totalorder %s52, %s54
      %p61 = scmp.eq.s32.totalorder %s23, 1
      %p62 = por %p60, %p61
      %p63 = scmp.ne.s32.totalorder %s54, %s55
      %p64 = scmp.eq.s32.totalorder %s23, 0
      %p65 = por %p63, %p64
      %p66 = scmp.ne.s32.totalorder %s54, %s55
      %p67 = scmp.eq.s32.totalorder %s24, 1
      %p68 = por %p66, %p67
      %p70 = scmp.ne.s32.totalorder %s55, %s69
      %p71 = scmp.eq.s32.totalorder %s24, 0
      %p72 = por %p70, %p71
      %s74 = sadd.s32 %s73, 1
      %p77 = scmp.eq.s32.totalorder %s18, 1
      %p78 = scmp.ne.s32.totalorder %s73, %s75
      %p79 = scmp.eq.s32.totalorder %s18, 0
      %p80 = por %p78, %p79
      %p81 = scmp.ne.s32.totalorder %s73, %s75
      %p82 = scmp.eq.s32.totalorder %s23, 1
      %p83 = por %p81, %p82
      %p84 = scmp.ne.s32.totalorder %s75, %s76
      %p85 = scmp.eq.s32.totalorder %s23, 0
      %p86 = por %p84, %p85
      %p87 = scmp.ne.s32.totalorder %s75, %s76
      %p88 = scmp.eq.s32.totalorder %s24, 1
      %p89 = por %p87, %p88
      %p91 = scmp.ne.s32.totalorder %s76, %s90
      %p92 = scmp.eq.s32.totalorder %s24, 0
      %p93 = por %p91, %p92
      %s95 = sadd.s32 %s94, 1
      %p98 = scmp.eq.s32.totalorder %s18, 1
      %p99 = scmp.ne.s32.totalorder %s94, %s96
      %p100 = scmp.eq.s32.totalorder %s18, 0
      %p101 = por %p99, %p100
      %p102 = scmp.ne.s32.totalorder %s94, %s96
      %p103 = scmp.eq.s32.totalorder %s23, 1
      %p104 = por %p102, %p103
      %p105 = scmp.ne.s32.totalorder %s96, %s97
      %p106 = scmp.eq.s32.totalorder %s23, 0
      %p107 = por %p105, %p106
      %p108 = scmp.ne.s32.totalorder %s96, %s97
      %p109 = scmp.eq.s32.totalorder %s24, 1
      %p110 = por %p108, %p109
      %p112 = scmp.ne.s32.totalorder %s97, %s111
      %p113 = scmp.eq.s32.totalorder %s24, 0
      %p114 = por %p112, %p113
      %s116 = sadd.s32 %s115, 1
      %p119 = scmp.eq.s32.totalorder %s18, 1
      %p120 = scmp.ne.s32.totalorder %s115, %s117
      %p121 = scmp.eq.s32.totalorder %s18, 0
      %p122 = por %p120, %p121
      %p123 = scmp.ne.s32.totalorder %s115, %s117
      %p124 = scmp.eq.s32.totalorder %s23, 1
      %p125 = por %p123, %p124
      %p126 = scmp.ne.s32.totalorder %s117, %s118
      %p127 = scmp.eq.s32.totalorder %s23, 0
      %p128 = por %p126, %p127
      %p129 = scmp.ne.s32.totalorder %s117, %s118
      %p130 = scmp.eq.s32.totalorder %s24, 1
      %p131 = por %p129, %p130
      %p133 = scmp.ne.s32.totalorder %s118, %s132
      %p134 = scmp.eq.s32.totalorder %s24, 0
      %p135 = por %p133, %p134
      %s137 = sadd.s32 %s136, 1
      %p140 = scmp.eq.s32.totalorder %s18, 1
      %p141 = scmp.ne.s32.totalorder %s136, %s138
      %p142 = scmp.eq.s32.totalorder %s18, 0
      %p143 = por %p141, %p142
      %p144 = scmp.ne.s32.totalorder %s136, %s138
      %p145 = scmp.eq.s32.totalorder %s23, 1
      %p146 = por %p144, %p145
      %p147 = scmp.ne.s32.totalorder %s138, %s139
      %p148 = scmp.eq.s32.totalorder %s23, 0
      %p149 = por %p147, %p148
      %p150 = scmp.ne.s32.totalorder %s138, %s139
      %p151 = scmp.eq.s32.totalorder %s24, 1
      %p152 = por %p150, %p151
      %p154 = scmp.ne.s32.totalorder %s139, %s153
      %p155 = scmp.eq.s32.totalorder %s24, 0
      %p156 = por %p154, %p155
      %s158 = sadd.s32 %s157, 1
      %p161 = scmp.eq.s32.totalorder %s18, 1
      %p162 = scmp.ne.s32.totalorder %s157, %s159
      %p163 = scmp.eq.s32.totalorder %s18, 0
      %p164 = por %p162, %p163
      %p165 = scmp.ne.s32.totalorder %s157, %s159
      %p166 = scmp.eq.s32.totalorder %s23, 1
      %p167 = por %p165, %p166
      %p168 = scmp.ne.s32.totalorder %s159, %s160
      %p169 = scmp.eq.s32.totalorder %s23, 0
      %p170 = por %p168, %p169
      %p171 = scmp.ne.s32.totalorder %s159, %s160
      %p172 = scmp.eq.s32.totalorder %s24, 1
      %p173 = por %p171, %p172
      %p175 = scmp.ne.s32.totalorder %s160, %s174
      %p176 = scmp.eq.s32.totalorder %s24, 0
      %p177 = por %p175, %p176
      %s178 = ssub.s32 %s18, %s25
      %p179 = scmp.eq.s32.totalorder %s178, 0
      %s181 = sadd.s32 %s180, 1
      %s182 = scalar_select %p179, %s180, %s181
      %p185 = pneg %p179
      %p186 = scmp.eq.s32.totalorder %s18, 1
      %p187 = por %p185, %p186
      %p188 = scmp.ne.s32.totalorder %s180, %s183
      %p189 = scmp.eq.s32.totalorder %s18, 0
      %p190 = por %p188, %p189
      %p191 = scmp.ne.s32.totalorder %s180, %s183
      %p192 = scmp.eq.s32.totalorder %s23, 1
      %p193 = por %p191, %p192
      %p194 = scmp.ne.s32.totalorder %s183, %s184
      %p195 = scmp.eq.s32.totalorder %s23, 0
      %p196 = por %p194, %p195
      %p197 = scmp.ne.s32.totalorder %s183, %s184
      %p198 = scmp.eq.s32.totalorder %s24, 1
      %p199 = por %p197, %p198
      %p201 = scmp.ne.s32.totalorder %s184, %s200
      %p202 = scmp.eq.s32.totalorder %s24, 0
      %p203 = por %p201, %p202
      %s204 = ssub.s32 %s18, %s25
      %p205 = scmp.eq.s32.totalorder %s204, 0
      %s207 = sadd.s32 %s206, 1
      %s208 = scalar_select %p205, %s206, %s207
      %p211 = pneg %p205
      %p212 = scmp.eq.s32.totalorder %s18, 1
      %p213 = por %p211, %p212
      %p214 = scmp.ne.s32.totalorder %s206, %s209
      %p215 = scmp.eq.s32.totalorder %s18, 0
      %p216 = por %p214, %p215
      %p217 = scmp.ne.s32.totalorder %s206, %s209
      %p218 = scmp.eq.s32.totalorder %s23, 1
      %p219 = por %p217, %p218
      %p220 = scmp.ne.s32.totalorder %s209, %s210
      %p221 = scmp.eq.s32.totalorder %s23, 0
      %p222 = por %p220, %p221
      %p223 = scmp.ne.s32.totalorder %s209, %s210
      %p224 = scmp.eq.s32.totalorder %s24, 1
      %p225 = por %p223, %p224
      %p227 = scmp.ne.s32.totalorder %s210, %s226
      %p228 = scmp.eq.s32.totalorder %s24, 0
      %p229 = por %p227, %p228
      %p230 = scmp.le.s32.totalorder 1, %s18
      %p231 = scmp.lt.s32.totalorder %s18, 3
      %p232 = pnand %p230, %p231
      %p233 = pneg %p232
      // Predicated region
      $region9: #{forward.1} parent=5 // pred_check
        _
      $region10: #{forward.1} parent=5 // pred_check_branch
        %235 = sbr.rel (%p232) target = $region12
      $region11: #{forward.1} parent=5 // pred_region
        %s236 = ssub.s32 %s18, 1
        // Predicated region
        $region13: #{forward.1} parent=11 // pred_check
          %p237 = pneg %p65
        $region14: #{forward.1} parent=11 // pred_check_branch
          %239 = sbr.rel (%p237) target = $region16
        $region15: #{forward.1} parent=11 // pred_region
          _
        $region16: #{forward.1} parent=11 // pred_fallthru
          _
        // Predicated region
        $region17: #{forward.1} parent=11 // pred_check
          %p240 = pneg %p86
        $region18: #{forward.1} parent=11 // pred_check_branch
          %242 = sbr.rel (%p240) target = $region20
        $region19: #{forward.1} parent=11 // pred_region
          _
        $region20: #{forward.1} parent=11 // pred_fallthru
          _
        // Predicated region
        $region21: #{forward.1} parent=11 // pred_check
          %p243 = pneg %p107
        $region22: #{forward.1} parent=11 // pred_check_branch
          %245 = sbr.rel (%p243) target = $region24
        $region23: #{forward.1} parent=11 // pred_region
          _
        $region24: #{forward.1} parent=11 // pred_fallthru
          _
        // Predicated region
        $region25: #{forward.1} parent=11 // pred_check
          %p246 = pneg %p128
        $region26: #{forward.1} parent=11 // pred_check_branch
          %248 = sbr.rel (%p246) target = $region28
        $region27: #{forward.1} parent=11 // pred_region
          _
        $region28: #{forward.1} parent=11 // pred_fallthru
          _
        // Predicated region
        $region29: #{forward.1} parent=11 // pred_check
          %p249 = pneg %p149
        $region30: #{forward.1} parent=11 // pred_check_branch
          %251 = sbr.rel (%p249) target = $region32
        $region31: #{forward.1} parent=11 // pred_region
          _
        $region32: #{forward.1} parent=11 // pred_fallthru
          _
        // Predicated region
        $region33: #{forward.1} parent=11 // pred_check
          %p252 = pneg %p170
        $region34: #{forward.1} parent=11 // pred_check_branch
          %254 = sbr.rel (%p252) target = $region36
        $region35: #{forward.1} parent=11 // pred_region
          _
        $region36: #{forward.1} parent=11 // pred_fallthru
          _
      $region12: #{forward.1} parent=5 // pred_fallthru
        _
      %p255 = scmp.lt.s32.totalorder %s18, 2
      // Predicated region
      $region37: #{forward.1} parent=5 // pred_check
        %p256 = pneg %p255
      $region38: #{forward.1} parent=5 // pred_check_branch
        %258 = sbr.rel (%p256) target = $region40
      $region39: #{forward.1} parent=5 // pred_region
        // Predicated region
        $region41: #{forward.1} parent=39 // pred_check
          %p259 = pneg %p38
        $region42: #{forward.1} parent=39 // pred_check_branch
          %261 = sbr.rel (%p259) target = $region44
        $region43: #{forward.1} parent=39 // pred_region
          %p262 = scmp.lt.s32.totalorder %s18, 1
          %s263 = scalar_select %p262, %s18, 1
          %s264 = smul.addr %s263, 2
          %s265 = smul.addr %s264, 4
          %s266 = scalar_lea.vmem %s0, %s265
        $region44: #{forward.1} parent=39 // pred_fallthru
          _
      $region40: #{forward.1} parent=5 // pred_fallthru
        _
      %p267 = scmp.le.s32.totalorder 1, %s18
      %p268 = scmp.lt.s32.totalorder %s18, 3
      %p269 = pnand %p267, %p268
      %p270 = pneg %p269
      // Predicated region
      $region45: #{forward.1} parent=5 // pred_check
        _
      $region46: #{forward.1} parent=5 // pred_check_branch
        %272 = sbr.rel (%p269) target = $region48
      $region47: #{forward.1} parent=5 // pred_region
        %s273 = ssub.s32 %s18, 1
        %p274 = scmp.lt.s32.totalorder %s23, 1
        %s275 = scalar_select %p274, %s23, 1
        %s276 = smul.addr %s275, 2
        %s277 = smul.addr %s276, 4
        %s278 = scalar_lea.vmem %s0, %s277
        %p279 = pneg %p44
        %p280 = pneg %p41
        %p281 = pneg %p65
        %p282 = pneg %p62
        %p283 = pneg %p86
        %p284 = pneg %p83
        %p285 = pneg %p107
        %p286 = pneg %p104
        %p287 = pneg %p128
        %p288 = pneg %p125
        %p289 = pneg %p149
        %p290 = pneg %p146
        %p291 = pneg %p170
        %p292 = pneg %p167
        %p293 = pneg %p196
        %p294 = pneg %p193
        %p295 = scmp.lt.s32.totalorder %s23, 1
        %s296 = scalar_select %p295, %s23, 1
        %s297 = smul.addr %s296, 2
        %s298 = smul.addr %s297, 8
        %s299 = scalar_lea.vmem %s7, %s298
        %p300 = pneg %p222
        %p301 = pneg %p219
        %s302 = sand.u32 %s209, 1
        %s303 = scalar_lea.sflag [#allocation3], %s302
        %s304 = sand.u32 %s209, 1
        %s305 = scalar_lea.vmem [#allocation2], %s304
        %p306 = scmp.lt.s32.totalorder %s23, 1
        %s307 = scalar_select %p306, %s23, 1
        %s308 = smul.addr %s307, 2
        %s309 = smul.addr %s308, 4
        %s310 = scalar_lea.vmem %s0, %s309
        %p311 = scmp.lt.s32.totalorder %s23, 1
        %s312 = scalar_select %p311, %s23, 1
        %s313 = smul.addr %s312, 2
        %s314 = smul.addr %s313, 8
        %s315 = scalar_lea.vmem %s7, %s314
        %v317 = vld [vmem:[%s310] sm:$0xf]
        %v318 = vld [vmem:[%s310 + $0x4] sm:$0xf]
        %v319 = vld [vmem:[%s1] sm:$0xf]
        %v320 = vld [vmem:[%s1 + $0x4] sm:$0xf]
        %v321 = vld [vmem:[%s1 + $0x8] sm:$0xf]
        %v322 = vld [vmem:[%s1 + $0xc] sm:$0xf]
        %v323 = vld [vmem:[%s1 + $0x10] sm:$0xf]
        %v324 = vld [vmem:[%s1 + $0x14] sm:$0xf]
        %v325 = vld [vmem:[%s1 + $0x18] sm:$0xf]
        %v326 = vld [vmem:[%s1 + $0x1c] sm:$0xf]
        %v327 = vld [vmem:[%s1 + $0x20] sm:$0xf]
        %v328 = vld [vmem:[%s1 + $0x24] sm:$0xf]
        %v329 = vld [vmem:[%s1 + $0x28] sm:$0xf]
        %v330 = vld [vmem:[%s1 + $0x2c] sm:$0xf]
        %v331 = vld [vmem:[%s1 + $0x30] sm:$0xf]
        %v332 = vld [vmem:[%s1 + $0x34] sm:$0xf]
        %v333 = vld [vmem:[%s1 + $0x38] sm:$0xf]
        %v334 = vld [vmem:[%s1 + $0x3c] sm:$0xf]
        %v335 = vld [vmem:[%s2] sm:$0x1]
        %v337 = vlaneseq
        %v338 = vshrl.u32 %v337, 7
        %v339 = vsub.s32 0, %v338
        %v340 = vrot.slane %v335, %v339
        %v344 = vunpack.c.l.b16 %v317
        %v345 = vunpack.c.l.b16 %v318
        %v346 = vpack.c.b16 %v345, %v344
        %v364 = vunpack.c.l.b16 %v319
        %v365 = vunpack.c.l.b16 %v320
        %v366 = vunpack.c.l.b16 %v321
        %v367 = vunpack.c.l.b16 %v322
        %v368 = vunpack.c.l.b16 %v323
        %v369 = vunpack.c.l.b16 %v324
        %v370 = vunpack.c.l.b16 %v325
        %v371 = vunpack.c.l.b16 %v326
        %v372 = vunpack.c.l.b16 %v327
        %v373 = vunpack.c.l.b16 %v328
        %v374 = vunpack.c.l.b16 %v329
        %v375 = vunpack.c.l.b16 %v330
        %v376 = vunpack.c.l.b16 %v331
        %v377 = vunpack.c.l.b16 %v332
        %v378 = vunpack.c.l.b16 %v333
        %v379 = vunpack.c.l.b16 %v334
        %v380 = vpack.c.b16 %v365, %v364
        %v381 = vpack.c.b16 %v367, %v366
        %v382 = vpack.c.b16 %v369, %v368
        %v383 = vpack.c.b16 %v371, %v370
        %v384 = vpack.c.b16 %v373, %v372
        %v385 = vpack.c.b16 %v375, %v374
        %v386 = vpack.c.b16 %v377, %v376
        %v387 = vpack.c.b16 %v379, %v378
        %396 = vmatprep.subr.bf16.mxu0 0
        %397 = vmatpush1.bf16.msra.mxu0 %v387
        %398 = vmatprep.subr.bf16.mxu0 0
        %399 = vmatpush1.bf16.msra.mxu0 %v386
        %400 = vmatprep.subr.bf16.mxu0 0
        %401 = vmatpush1.bf16.msra.mxu0 %v385
        %402 = vmatprep.subr.bf16.mxu0 0
        %403 = vmatpush1.bf16.msra.mxu0 %v384
        %404 = vmatprep.subr.bf16.mxu0 0
        %405 = vmatpush1.bf16.msra.mxu0 %v383
        %406 = vmatprep.subr.bf16.mxu0 0
        %407 = vmatpush1.bf16.msra.mxu0 %v382
        %408 = vmatprep.subr.bf16.mxu0 0
        %409 = vmatpush1.bf16.msra.mxu0 %v381
        %410 = vmatprep.subr.bf16.mxu0 0
        %411 = vmatpush1.bf16.msra.mxu0 %v380
        %412 = vmatprep.subr.bf16.mxu0 0
        %413 = vmatpush2.bf16.msra.mxu0 0
        %414 = vmatprep.subr.bf16.mxu0 0
        %415 = vmatpush2.bf16.msra.mxu0 0
        %416 = vmatprep.subr.bf16.mxu0 0
        %417 = vmatpush2.bf16.msra.mxu0 0
        %418 = vmatprep.subr.bf16.mxu0 0
        %419 = vmatpush2.bf16.msra.mxu0 0
        %420 = vmatprep.subr.bf16.mxu0 0
        %421 = vmatpush2.bf16.msra.mxu0 0
        %422 = vmatprep.subr.bf16.mxu0 0
        %423 = vmatpush2.bf16.msra.mxu0 0
        %424 = vmatprep.subr.bf16.mxu0 0
        %425 = vmatpush2.bf16.msra.mxu0 0
        %426 = vmatprep.subr.bf16.mxu0 0
        %427 = vmatpush2.bf16.msra.mxu0 0
        %428 = vmatprep.mubr.bf16.mxu0 0
        %429 = vmatmul.mubr.bf16.gmra.mxu0 %v346
        %v430 = vpop.f32.mrf.mxu0
        %v431 = vadd.f32 %v340, %v430
        %v432 = vpop.f32.mrf.mxu0
        %v433 = vpop.f32.mrf.mxu0
        %v434 = vadd.f32 %v340, %v433
        %v435 = vpop.f32.mrf.mxu0
        %436 = vdwg.mxu0
        %437 = vst [vmem:[%s315] sm:$0xff] %v431
        %438 = vst [vmem:[%s315 + $0x8] sm:$0xff] %v434
        %v439 = vmax.f32 %v431, %v434
        %v440 = vrot.slane %v439, 4
        %v441 = vmax.f32 %v439, %v440
        %v442 = vrot.slane %v441, 2
        %v443 = vmax.f32 %v441, %v442
        %v444 = vrot.slane %v443, 1
        %v445 = vmax.f32 %v443, %v444
        %v446 = vpack.c.bf16 %v445, %v445
        %v447 = vld [vmem:[%s3] sm:$0xf]
        %v448 = vld [vmem:[%s3 + $0x4] sm:$0xf]
        %v449 = vld [vmem:[%s3 + $0x8] sm:$0xf]
        %v450 = vld [vmem:[%s3 + $0xc] sm:$0xf]
        %v451 = vld [vmem:[%s3 + $0x10] sm:$0xf]
        %v452 = vld [vmem:[%s3 + $0x14] sm:$0xf]
        %v453 = vld [vmem:[%s3 + $0x18] sm:$0xf]
        %v454 = vld [vmem:[%s3 + $0x1c] sm:$0xf]
        %v455 = vld [vmem:[%s3 + $0x20] sm:$0xf]
        %v456 = vld [vmem:[%s3 + $0x24] sm:$0xf]
        %v457 = vld [vmem:[%s3 + $0x28] sm:$0xf]
        %v458 = vld [vmem:[%s3 + $0x2c] sm:$0xf]
        %v459 = vld [vmem:[%s3 + $0x30] sm:$0xf]
        %v460 = vld [vmem:[%s3 + $0x34] sm:$0xf]
        %v461 = vld [vmem:[%s3 + $0x38] sm:$0xf]
        %v462 = vld [vmem:[%s3 + $0x3c] sm:$0xf]
        %v463 = vld [vmem:[%s4] sm:$0x1]
        %v480 = vunpack.c.l.b16 %v447
        %v481 = vunpack.c.l.b16 %v448
        %v482 = vunpack.c.l.b16 %v449
        %v483 = vunpack.c.l.b16 %v450
        %v484 = vunpack.c.l.b16 %v451
        %v485 = vunpack.c.l.b16 %v452
        %v486 = vunpack.c.l.b16 %v453
        %v487 = vunpack.c.l.b16 %v454
        %v488 = vunpack.c.l.b16 %v455
        %v489 = vunpack.c.l.b16 %v456
        %v490 = vunpack.c.l.b16 %v457
        %v491 = vunpack.c.l.b16 %v458
        %v492 = vunpack.c.l.b16 %v459
        %v493 = vunpack.c.l.b16 %v460
        %v494 = vunpack.c.l.b16 %v461
        %v495 = vunpack.c.l.b16 %v462
        %v496 = vpack.c.b16 %v481, %v480
        %v497 = vpack.c.b16 %v483, %v482
        %v498 = vpack.c.b16 %v485, %v484
        %v499 = vpack.c.b16 %v487, %v486
        %v500 = vpack.c.b16 %v489, %v488
        %v501 = vpack.c.b16 %v491, %v490
        %v502 = vpack.c.b16 %v493, %v492
        %v503 = vpack.c.b16 %v495, %v494
        %512 = vmatprep.subr.bf16.mxu0 0
        %513 = vmatpush1.bf16.msra.mxu0 %v503
        %514 = vmatprep.subr.bf16.mxu0 0
        %515 = vmatpush1.bf16.msra.mxu0 %v502
        %516 = vmatprep.subr.bf16.mxu0 0
        %517 = vmatpush1.bf16.msra.mxu0 %v501
        %518 = vmatprep.subr.bf16.mxu0 0
        %519 = vmatpush1.bf16.msra.mxu0 %v500
        %520 = vmatprep.subr.bf16.mxu0 0
        %521 = vmatpush1.bf16.msra.mxu0 %v499
        %522 = vmatprep.subr.bf16.mxu0 0
        %523 = vmatpush1.bf16.msra.mxu0 %v498
        %524 = vmatprep.subr.bf16.mxu0 0
        %525 = vmatpush1.bf16.msra.mxu0 %v497
        %526 = vmatprep.subr.bf16.mxu0 0
        %527 = vmatpush1.bf16.msra.mxu0 %v496
        %528 = vmatprep.subr.bf16.mxu0 0
        %529 = vmatpush2.bf16.msra.mxu0 0
        %530 = vmatprep.subr.bf16.mxu0 0
        %531 = vmatpush2.bf16.msra.mxu0 0
        %532 = vmatprep.subr.bf16.mxu0 0
        %533 = vmatpush2.bf16.msra.mxu0 0
        %534 = vmatprep.subr.bf16.mxu0 0
        %535 = vmatpush2.bf16.msra.mxu0 0
        %536 = vmatprep.subr.bf16.mxu0 0
        %537 = vmatpush2.bf16.msra.mxu0 0
        %538 = vmatprep.subr.bf16.mxu0 0
        %539 = vmatpush2.bf16.msra.mxu0 0
        %540 = vmatprep.subr.bf16.mxu0 0
        %541 = vmatpush2.bf16.msra.mxu0 0
        %542 = vmatprep.subr.bf16.mxu0 0
        %543 = vmatpush2.bf16.msra.mxu0 0
        %544 = vmatprep.mubr.bf16.mxu0 0
        %545 = vmatmul.mubr.bf16.gmra.mxu0 %v446
        %v546 = vpop.f32.mrf.mxu0
        %v547 = vadd.f32 %v463, %v546
        %v548 = vpop.f32.mrf.mxu0
        %v549 = vpop.f32.mrf.mxu0
        %v550 = vpop.f32.mrf.mxu0
        %551 = vdwg.mxu0
        %v552 = vpack.c.bf16 %v547, %v547
        %v553 = vld [vmem:[%s5] sm:$0xf]
        %v554 = vld [vmem:[%s5 + $0x4] sm:$0xf]
        %v555 = vld [vmem:[%s5 + $0x8] sm:$0xf]
        %v556 = vld [vmem:[%s5 + $0xc] sm:$0xf]
        %v557 = vld [vmem:[%s5 + $0x10] sm:$0xf]
        %v558 = vld [vmem:[%s5 + $0x14] sm:$0xf]
        %v559 = vld [vmem:[%s5 + $0x18] sm:$0xf]
        %v560 = vld [vmem:[%s5 + $0x1c] sm:$0xf]
        %v561 = vld [vmem:[%s5 + $0x20] sm:$0xf]
        %v562 = vld [vmem:[%s5 + $0x24] sm:$0xf]
        %v563 = vld [vmem:[%s5 + $0x28] sm:$0xf]
        %v564 = vld [vmem:[%s5 + $0x2c] sm:$0xf]
        %v565 = vld [vmem:[%s5 + $0x30] sm:$0xf]
        %v566 = vld [vmem:[%s5 + $0x34] sm:$0xf]
        %v567 = vld [vmem:[%s5 + $0x38] sm:$0xf]
        %v568 = vld [vmem:[%s5 + $0x3c] sm:$0xf]
        %v569 = vld [vmem:[%s6] sm:$0x1]
        %v586 = vunpack.c.l.b16 %v553
        %v587 = vunpack.c.l.b16 %v554
        %v588 = vunpack.c.l.b16 %v555
        %v589 = vunpack.c.l.b16 %v556
        %v590 = vunpack.c.l.b16 %v557
        %v591 = vunpack.c.l.b16 %v558
        %v592 = vunpack.c.l.b16 %v559
        %v593 = vunpack.c.l.b16 %v560
        %v594 = vunpack.c.l.b16 %v561
        %v595 = vunpack.c.l.b16 %v562
        %v596 = vunpack.c.l.b16 %v563
        %v597 = vunpack.c.l.b16 %v564
        %v598 = vunpack.c.l.b16 %v565
        %v599 = vunpack.c.l.b16 %v566
        %v600 = vunpack.c.l.b16 %v567
        %v601 = vunpack.c.l.b16 %v568
        %v602 = vpack.c.b16 %v587, %v586
        %v603 = vpack.c.b16 %v589, %v588
        %v604 = vpack.c.b16 %v591, %v590
        %v605 = vpack.c.b16 %v593, %v592
        %v606 = vpack.c.b16 %v595, %v594
        %v607 = vpack.c.b16 %v597, %v596
        %v608 = vpack.c.b16 %v599, %v598
        %v609 = vpack.c.b16 %v601, %v600
        %618 = vmatprep.subr.bf16.mxu0 0
        %619 = vmatpush1.bf16.msra.mxu0 %v609
        %620 = vmatprep.subr.bf16.mxu0 0
        %621 = vmatpush1.bf16.msra.mxu0 %v608
        %622 = vmatprep.subr.bf16.mxu0 0
        %623 = vmatpush1.bf16.msra.mxu0 %v607
        %624 = vmatprep.subr.bf16.mxu0 0
        %625 = vmatpush1.bf16.msra.mxu0 %v606
        %626 = vmatprep.subr.bf16.mxu0 0
        %627 = vmatpush1.bf16.msra.mxu0 %v605
        %628 = vmatprep.subr.bf16.mxu0 0
        %629 = vmatpush1.bf16.msra.mxu0 %v604
        %630 = vmatprep.subr.bf16.mxu0 0
        %631 = vmatpush1.bf16.msra.mxu0 %v603
        %632 = vmatprep.subr.bf16.mxu0 0
        %633 = vmatpush1.bf16.msra.mxu0 %v602
        %634 = vmatprep.subr.bf16.mxu0 0
        %635 = vmatpush2.bf16.msra.mxu0 0
        %636 = vmatprep.subr.bf16.mxu0 0
        %637 = vmatpush2.bf16.msra.mxu0 0
        %638 = vmatprep.subr.bf16.mxu0 0
        %639 = vmatpush2.bf16.msra.mxu0 0
        %640 = vmatprep.subr.bf16.mxu0 0
        %641 = vmatpush2.bf16.msra.mxu0 0
        %642 = vmatprep.subr.bf16.mxu0 0
        %643 = vmatpush2.bf16.msra.mxu0 0
        %644 = vmatprep.subr.bf16.mxu0 0
        %645 = vmatpush2.bf16.msra.mxu0 0
        %646 = vmatprep.subr.bf16.mxu0 0
        %647 = vmatpush2.bf16.msra.mxu0 0
        %648 = vmatprep.subr.bf16.mxu0 0
        %649 = vmatpush2.bf16.msra.mxu0 0
        %650 = vmatprep.mubr.bf16.mxu0 0
        %651 = vmatmul.mubr.bf16.gmra.mxu0 %v552
        %v652 = vpop.f32.mrf.mxu0
        %v653 = vadd.f32 %v569, %v652
        %v654 = vpop.f32.mrf.mxu0
        %v655 = vpop.f32.mrf.mxu0
        %v656 = vpop.f32.mrf.mxu0
        %657 = vdwg.mxu0
        %658 = vst [vmem:[%s305] sm:$0x1] %v653
        %p659 = scmp.lt.s32.totalorder %s23, 1
        %s660 = scalar_select %p659, %s23, 1
        %s661 = smul.addr %s660, 2
        %s662 = smul.addr %s661, 8
        %s663 = scalar_lea.vmem %s7, %s662
        %s664 = sand.u32 %s209, 1
        %s665 = scalar_lea.sflag [#allocation3], %s664
        %s666 = sand.u32 %s209, 1
        %s667 = scalar_lea.vmem [#allocation2], %s666
        // Predicated region
        $region49: #{forward.1} parent=47 // pred_check
          %p668 = pneg %p193
        $region50: #{forward.1} parent=47 // pred_check_branch
          %670 = sbr.rel (%p668) target = $region52
        $region51: #{forward.1} parent=47 // pred_region
          _
        $region52: #{forward.1} parent=47 // pred_fallthru
          _
        // Predicated region
        $region53: #{forward.1} parent=47 // pred_check
          %p671 = pneg %p219
        $region54: #{forward.1} parent=47 // pred_check_branch
          %673 = sbr.rel (%p671) target = $region56
        $region55: #{forward.1} parent=47 // pred_region
          %s675 = ssub.s32 16, 16
          %676 = vsyncadd %s665, %s675
          %s677 = smul.addr %s23, 16
          %s678 = scalar_lea.hbm %s8, %s677
          %s680 = sshll.u32 %s667, 4
          %s681 = int_to_ptr.vmem [resolvable:$true] %s680
          %683 = dma.vmem_to_hbm [thread:$0]  %s681, 16, %s678, %s665
        $region56: #{forward.1} parent=47 // pred_fallthru
          _
      $region48: #{forward.1} parent=5 // pred_fallthru
        _
      %p684 = scmp.le.s32.totalorder 2, %s18
      // Predicated region
      $region57: #{forward.1} parent=5 // pred_check
        %p685 = pneg %p684
      $region58: #{forward.1} parent=5 // pred_check_branch
        %687 = sbr.rel (%p685) target = $region60
      $region59: #{forward.1} parent=5 // pred_region
        %s688 = ssub.s32 %s18, 2
        // Predicated region
        $region61: #{forward.1} parent=59 // pred_check
          %p689 = pneg %p199
        $region62: #{forward.1} parent=59 // pred_check_branch
          %691 = sbr.rel (%p689) target = $region64
        $region63: #{forward.1} parent=59 // pred_region
          %p692 = scmp.lt.s32.totalorder %s24, 1
          %s693 = scalar_select %p692, %s24, 1
          %s694 = smul.addr %s693, 2
          %s695 = smul.addr %s694, 8
          %s696 = scalar_lea.vmem %s7, %s695
        $region64: #{forward.1} parent=59 // pred_fallthru
          _
        // Predicated region
        $region65: #{forward.1} parent=59 // pred_check
          %p697 = pneg %p225
        $region66: #{forward.1} parent=59 // pred_check_branch
          %699 = sbr.rel (%p697) target = $region68
        $region67: #{forward.1} parent=59 // pred_region
          %s700 = sand.u32 %s210, 1
          %s701 = scalar_lea.sflag [#allocation3], %s700
          %s702 = sand.u32 %s210, 1
          %s703 = scalar_lea.vmem [#allocation2], %s702
          %704 = dma.done %s701, 16
        $region68: #{forward.1} parent=59 // pred_fallthru
          _
      $region60: #{forward.1} parent=5 // pred_fallthru
        _
    $region6: #{forward.1} parent=1 // loop_footer
      %s22 = sadd.s32 1, %s18
    $region7: #{forward.1} parent=1 // loop_footer_branch
      %17 = sbr.rel target = $region3
    $region8: #{forward.1} parent=1 // loop_exit
      _
    %705 = vsyncpa [#allocation3], 1
    %s706 = scalar_lea.sflag [#allocation3], 1
    %707 = vsyncpa %s706, 1

</llo_original>
